<compile_context>
chip_gen: v5e
topology: v5e:2x2
jax: 0.10.0
libtpu: 0.0.40
codegen_flags: <defaults>
</compile_context>

<pallas_src>
import functools
import math

import jax
import jax.numpy as jnp
from jax import lax
from jax.experimental import pallas as pl
from jax.experimental.pallas import tpu as pltpu


def _round_up(x, m):
    return ((x + m - 1) // m) * m


def _cdiv(a, b):
    return (a + b - 1) // b


def _ts_cov_kernel(pj_ref, pk_ref, x_ref, o_ref, *, d, stride, w_blk):
    # pj_ref, pk_ref: (h_blk, n) one-hot pair selectors for this pair-block
    # x_ref:          (n, T_blk)  series slice covering this window-block
    # o_ref:          (w_blk, h_blk) output block (pair axis lane-dense)
    x = x_ref[...]
    # Shift each series by its block mean: covariance is shift-invariant, so this
    # is exact, and it kills cancellation in the uncentered-moment formulation.
    x = x - jnp.mean(x, axis=1, keepdims=True)
    t_blk = x.shape[1]

    # Window-indicator matrix generated in-kernel (block-invariant): window r of
    # this block starts at local offset r*stride and has length d.
    t = lax.broadcasted_iota(jnp.int32, (w_blk, t_blk), 1)
    r = lax.broadcasted_iota(jnp.int32, (w_blk, t_blk), 0)
    start = r * stride
    wind = ((t >= start) & (t < start + d)).astype(jnp.float32)   # (w_blk, T_blk)

    pj = pj_ref[...]                                              # (h_blk, n)
    pk = pk_ref[...]

    # Per-window per-series sums, window-major: sT[i, j] = sum_{t in win i} x[j, t]
    sT = lax.dot_general(wind, x, (((1,), (1,)), ((), ())),
                         preferred_element_type=jnp.float32)      # (w_blk, n)

    # Pair rows gathered via one-hot matmuls (MXU; no sublane gathers/slices).
    # TODO(synk): for small n a per-window Gram (K=d) path avoids the K=n MAC
    # inflation of these gathers; the one-hot path is kept as the general one.
    xj = jnp.dot(pj, x, preferred_element_type=jnp.float32)       # (h_blk, T_blk)
    xk = jnp.dot(pk, x, preferred_element_type=jnp.float32)       # (h_blk, T_blk)
    y = xj * xk                                                   # VPU

    # Raw per-window second moment, window-major so the stored last axis (pairs)
    # is lane-dense: mT[i, p] = sum_{t in win i} x_j[t] * x_k[t]
    mT = lax.dot_general(wind, y, (((1,), (1,)), ((), ())),
                         preferred_element_type=jnp.float32)      # (w_blk, h_blk)
    sjT = lax.dot_general(sT, pj, (((1,), (1,)), ((), ())),
                          preferred_element_type=jnp.float32)     # (w_blk, h_blk)
    skT = lax.dot_general(sT, pk, (((1,), (1,)), ((), ())),
                          preferred_element_type=jnp.float32)     # (w_blk, h_blk)

    inv_d = 1.0 / d
    o_ref[...] = (mT - sjT * skT * inv_d) * inv_d


def ts_cov(X, d=10, stride=10):
    """X: (batch, n, T) -> (batch, n*(n-1)//2, w) float32, w = (T-d)//stride + 1."""
    batch, n, T = X.shape
    if n < 2:
        raise ValueError("ts_cov requires n >= 2 series")
    if T < d:
        raise ValueError("ts_cov requires T >= d")
    w = (T - d) // stride + 1
    h = n * (n - 1) // 2

    X = X.astype(jnp.float32)

    # ----- pair-axis (h) tiling -----
    H_BLK_MAX = 512
    if h <= H_BLK_MAX:
        h_blk = _round_up(h, 8)
        n_hblk = 1
    else:
        h_blk = H_BLK_MAX
        n_hblk = _cdiv(h, h_blk)
    h_pad = n_hblk * h_blk

    # ----- window-axis (w) tiling with matched time slices -----
    # Blocks of w_blk windows cover disjoint time ranges of T_blk = w_blk*stride
    # samples (requires stride >= d); w_blk is chosen so T_blk is a multiple of 128.
    if stride >= d:
        unit = 128 // math.gcd(stride, 128)
        w_blk_target = max(unit, (64 // unit) * unit) if unit <= 64 else unit
    else:
        # Overlapping windows (stride < d): fall back to a single window block.
        # TODO(synk): overlapping-window time blocking needs element-offset index maps.
        w_blk_target = w

    if stride >= d and w > w_blk_target:
        w_blk = w_blk_target
        n_wblk = _cdiv(w, w_blk)
        T_blk = w_blk * stride
        T_need = n_wblk * T_blk
        if T_need <= T:
            Xp = X[:, :, :T_need]
        else:
            Xp = jnp.pad(X, ((0, 0), (0, 0), (0, T_need - T)))
    else:
        w_blk = w
        n_wblk = 1
        T_blk = (w - 1) * stride + d          # drop unused trailing samples
        Xp = X[:, :, :T_blk]
    w_pad = n_wblk * w_blk

    # One-hot selectors for upper-triangular pairs (j < k, row-major), padded to
    # h_pad rows (padded rows are all-zero -> cov 0 -> sliced off below).
    ju, ku = jnp.triu_indices(n, k=1)
    pj = jnp.pad(jax.nn.one_hot(ju, n, dtype=jnp.float32), ((0, h_pad - h), (0, 0)))
    pk = jnp.pad(jax.nn.one_hot(ku, n, dtype=jnp.float32), ((0, h_pad - h), (0, 0)))

    kernel = functools.partial(_ts_cov_kernel, d=d, stride=stride, w_blk=w_blk)

    # Advisory cost estimate so XLA schedules surrounding ops correctly.
    macs = (2 * batch * h_pad * n * (n_wblk * T_blk)      # one-hot row gathers
            + batch * w_pad * h_pad * T_blk               # moment matmul
            + batch * n_hblk * w_pad * n * T_blk          # per-window sums
            + 2 * batch * w_pad * h_pad * n)              # sj / sk
    cost = pl.CostEstimate(
        flops=2 * macs,
        transcendentals=0,
        bytes_accessed=4 * (batch * n_hblk * n * n_wblk * T_blk
                            + 2 * n_wblk * h_pad * n
                            + batch * w_pad * h_pad),
    )

    # NOTE: pj/pk have constant-per-h-block index maps; single-buffering them
    # (pl.Buffered(1)) would save a little VMEM but is skipped — they are tiny.
    out = pl.pallas_call(
        kernel,
        out_shape=jax.ShapeDtypeStruct((batch, w_pad, h_pad), jnp.float32),
        grid_spec=pltpu.PrefetchScalarGridSpec(
            num_scalar_prefetch=0,
            # h-block axis innermost so the (n, T_blk) X tile stays resident across it.
            grid=(batch, n_wblk, n_hblk),
            in_specs=[
                pl.BlockSpec((h_blk, n), lambda b, wb, hb: (hb, 0)),          # pj
                pl.BlockSpec((h_blk, n), lambda b, wb, hb: (hb, 0)),          # pk
                pl.BlockSpec((None, n, T_blk), lambda b, wb, hb: (b, 0, wb)),  # X[b] time slice
            ],
            out_specs=pl.BlockSpec((None, w_blk, h_blk),
                                   lambda b, wb, hb: (b, wb, hb)),
        ),
        compiler_params=pltpu.CompilerParams(
            # Every grid step writes a distinct output block -> all axes parallel;
            # guarantees >= 2 parallel steps for v7x's two TensorCores even at batch=1.
            dimension_semantics=("parallel", "parallel", "parallel"),
            # Tiles are sized to fit v7x's 64 MiB VMEM with headroom.
            vmem_limit_bytes=48 * 1024 * 1024,
        ),
        cost_estimate=cost,
    )(pj, pk, Xp)

    # Kernel emits (batch, w_pad, h_pad) with the wide pair axis lane-dense
    # (unmasked stores); slice padding off and transpose to the module layout.
    return jnp.transpose(out[:, :w, :h], (0, 2, 1))


def ts_cov_ref(X, d=10, stride=10):
    """Pure-JAX reference mirroring the PyTorch loop (explicit per-window centering)."""
    batch, n, T = X.shape
    w = (T - d) // stride + 1
    ju, ku = jnp.triu_indices(n, k=1)
    cols = []
    for i in range(w):
        xw = X[:, :, i * stride:i * stride + d].astype(jnp.float32)
        xc = xw - xw.mean(axis=2, keepdims=True)
        gram = jnp.einsum("bjd,bkd->bjk", xc, xc) / d
        cols.append(gram[:, ju, ku])                             # (batch, h)
    return jnp.stack(cols, axis=-1)                              # (batch, h, w)


if __name__ == "__main__":
    d, stride = 10, 10
    key = jax.random.PRNGKey(0)

    # Small shape matching the module defaults: batch=2, n=4, T=40 -> h=6, w=4.
    batch, n, T = 2, 4, 40
    X = jax.random.normal(key, (batch, n, T), dtype=jnp.float32)
    Z = jax.block_until_ready(ts_cov(X, d=d, stride=stride))
    Z_ref = ts_cov_ref(X, d=d, stride=stride)
    assert Z.shape == Z_ref.shape == (batch, n * (n - 1) // 2, (T - d) // stride + 1)
    assert jnp.allclose(Z, Z_ref, atol=1e-5, rtol=1e-5), "mismatch vs reference (small)"

    # Shape exercising the window-block / pair-pad path: w=70 -> two window blocks.
    batch2, n2, T2 = 2, 5, 700
    X2 = jax.random.normal(jax.random.PRNGKey(0), (batch2, n2, T2), dtype=jnp.float32)
    Z2 = jax.block_until_ready(ts_cov(X2, d=d, stride=stride))
    Z2_ref = ts_cov_ref(X2, d=d, stride=stride)
    assert Z2.shape == Z2_ref.shape
    assert jnp.allclose(Z2, Z2_ref, atol=1e-4, rtol=1e-4), "mismatch vs reference (blocked)"

    print("KERNEL_OK")
</pallas_src>

<mosaic_0001>
module attributes {stable_mosaic.version = 11 : i64} {
  func.func @_ts_cov_kernel(%arg0: i32, %arg1: i32, %arg2: i32, %arg3: memref<8x4xf32, #tpu.memory_space<vmem>>, %arg4: memref<8x4xf32, #tpu.memory_space<vmem>>, %arg5: memref<1x4x40xf32, #tpu.memory_space<vmem>>, %arg6: memref<1x4x8xf32, #tpu.memory_space<vmem>>) attributes {dimension_semantics = [#tpu.dimension_semantics<parallel>, #tpu.dimension_semantics<parallel>, #tpu.dimension_semantics<parallel>], iteration_bounds = array<i64: 2, 1, 1>, scalar_prefetch = 0 : i64, scratch_operands = 0 : i64, tpu.core_type = #tpu.core_type<tc>, window_params = [{transform_indices = @transform_0, window_bounds = array<i64: 8, 4>}, {transform_indices = @transform_1, window_bounds = array<i64: 8, 4>}, {transform_indices = @transform_2, window_bounds = array<i64: 1, 4, 40>}, {transform_indices = @transform_3, window_bounds = array<i64: 1, 4, 8>}]} {
    %c0 = arith.constant 0 : index
    %c0_0 = arith.constant 0 : index
    %c0_1 = arith.constant 0 : index
    %0 = vector.load %arg5[%c0, %c0_0, %c0_1] : memref<1x4x40xf32, #tpu.memory_space<vmem>>, vector<1x4x40xf32>
    %1 = vector.shape_cast %0 : vector<1x4x40xf32> to vector<4x40xf32>
    %cst = arith.constant dense<0.000000e+00> : vector<4xf32>
    %2 = vector.multi_reduction <add>, %1, %cst [1] : vector<4x40xf32> to vector<4xf32>
    %3 = vector.shape_cast %2 : vector<4xf32> to vector<4x1xf32>
    %cst_2 = arith.constant 4.000000e+01 : f32
    %4 = vector.broadcast %cst_2 : f32 to vector<4x1xf32>
    %5 = arith.divf %3, %4 : vector<4x1xf32>
    %6 = vector.broadcast %5 : vector<4x1xf32> to vector<4x40xf32>
    %7 = arith.subf %1, %6 : vector<4x40xf32>
    %8 = tpu.iota {dimensions = array<i32: 1>} : vector<4x40xi32>
    %9 = tpu.iota {dimensions = array<i32: 0>} : vector<4x40xi32>
    %c10_i32 = arith.constant 10 : i32
    %10 = vector.broadcast %c10_i32 : i32 to vector<4x40xi32>
    %11 = arith.muli %9, %10 : vector<4x40xi32>
    %12 = arith.cmpi sge, %8, %11 : vector<4x40xi32>
    %c10_i32_3 = arith.constant 10 : i32
    %13 = vector.broadcast %c10_i32_3 : i32 to vector<4x40xi32>
    %14 = arith.addi %11, %13 : vector<4x40xi32>
    %15 = arith.cmpi slt, %8, %14 : vector<4x40xi32>
    %16 = arith.andi %12, %15 : vector<4x40xi1>
    %17 = arith.extui %16 : vector<4x40xi1> to vector<4x40xi32>
    %18 = arith.sitofp %17 : vector<4x40xi32> to vector<4x40xf32>
    %c0_4 = arith.constant 0 : index
    %c0_5 = arith.constant 0 : index
    %19 = vector.load %arg3[%c0_4, %c0_5] : memref<8x4xf32, #tpu.memory_space<vmem>>, vector<8x4xf32>
    %c0_6 = arith.constant 0 : index
    %c0_7 = arith.constant 0 : index
    %20 = vector.load %arg4[%c0_6, %c0_7] : memref<8x4xf32, #tpu.memory_space<vmem>>, vector<8x4xf32>
    %cst_8 = arith.constant dense<0.000000e+00> : vector<4x4xf32>
    %21 = tpu.matmul %18, %7, %cst_8 {dimension_numbers = #tpu.dot_dimension_numbers<[1], [1], [0], [0], [0, 0, 1, 0], [], []>} : vector<4x40xf32>, vector<4x40xf32>, vector<4x4xf32> -> vector<4x4xf32>
    %cst_9 = arith.constant dense<0.000000e+00> : vector<8x40xf32>
    %22 = tpu.matmul %19, %7, %cst_9 {dimension_numbers = #tpu.dot_dimension_numbers<[1], [0], [0], [1], [0, 0, 1, 1], [], []>} : vector<8x4xf32>, vector<4x40xf32>, vector<8x40xf32> -> vector<8x40xf32>
    %cst_10 = arith.constant dense<0.000000e+00> : vector<8x40xf32>
    %23 = tpu.matmul %20, %7, %cst_10 {dimension_numbers = #tpu.dot_dimension_numbers<[1], [0], [0], [1], [0, 0, 1, 1], [], []>} : vector<8x4xf32>, vector<4x40xf32>, vector<8x40xf32> -> vector<8x40xf32>
    %24 = arith.mulf %22, %23 : vector<8x40xf32>
    %cst_11 = arith.constant dense<0.000000e+00> : vector<4x8xf32>
    %25 = tpu.matmul %18, %24, %cst_11 {dimension_numbers = #tpu.dot_dimension_numbers<[1], [1], [0], [0], [0, 0, 1, 0], [], []>} : vector<4x40xf32>, vector<8x40xf32>, vector<4x8xf32> -> vector<4x8xf32>
    %cst_12 = arith.constant dense<0.000000e+00> : vector<4x8xf32>
    %26 = tpu.matmul %21, %19, %cst_12 {dimension_numbers = #tpu.dot_dimension_numbers<[1], [1], [0], [0], [0, 0, 1, 0], [], []>} : vector<4x4xf32>, vector<8x4xf32>, vector<4x8xf32> -> vector<4x8xf32>
    %cst_13 = arith.constant dense<0.000000e+00> : vector<4x8xf32>
    %27 = tpu.matmul %21, %20, %cst_13 {dimension_numbers = #tpu.dot_dimension_numbers<[1], [1], [0], [0], [0, 0, 1, 0], [], []>} : vector<4x4xf32>, vector<8x4xf32>, vector<4x8xf32> -> vector<4x8xf32>
    %28 = arith.mulf %26, %27 : vector<4x8xf32>
    %cst_14 = arith.constant 1.000000e-01 : f32
    %29 = vector.broadcast %cst_14 : f32 to vector<4x8xf32>
    %30 = arith.mulf %28, %29 : vector<4x8xf32>
    %31 = arith.subf %25, %30 : vector<4x8xf32>
    %cst_15 = arith.constant 1.000000e-01 : f32
    %32 = vector.broadcast %cst_15 : f32 to vector<4x8xf32>
    %33 = arith.mulf %31, %32 : vector<4x8xf32>
    %c0_16 = arith.constant 0 : index
    %c0_17 = arith.constant 0 : index
    %c0_18 = arith.constant 0 : index
    %34 = vector.load %arg6[%c0_16, %c0_17, %c0_18] : memref<1x4x8xf32, #tpu.memory_space<vmem>>, vector<1x4x8xf32>
    %35 = vector.shape_cast %34 : vector<1x4x8xf32> to vector<4x8xf32>
    %36 = vector.shape_cast %33 : vector<4x8xf32> to vector<1x4x8xf32>
    tpu.vector_store %arg6[%c0_16, %c0_17, %c0_18], %36 {strides = array<i32>} : memref<1x4x8xf32, #tpu.memory_space<vmem>>, vector<1x4x8xf32>,
    return
  }
  func.func @transform_0(%arg0: i32, %arg1: i32, %arg2: i32) -> (i32, i32) {
    %c0_i32 = arith.constant 0 : i32
    %c0_i32_0 = arith.constant 0 : i32
    return %arg2, %c0_i32 : i32, i32
  }
  func.func @transform_1(%arg0: i32, %arg1: i32, %arg2: i32) -> (i32, i32) {
    %c0_i32 = arith.constant 0 : i32
    %c0_i32_0 = arith.constant 0 : i32
    return %arg2, %c0_i32 : i32, i32
  }
  func.func @transform_2(%arg0: i32, %arg1: i32, %arg2: i32) -> (i32, i32, i32) {
    %c0_i32 = arith.constant 0 : i32
    %c0_i32_0 = arith.constant 0 : i32
    return %arg0, %c0_i32, %arg1 : i32, i32, i32
  }
  func.func @transform_3(%arg0: i32, %arg1: i32, %arg2: i32) -> (i32, i32, i32) {
    %c0_i32 = arith.constant 0 : i32
    return %arg0, %arg1, %arg2 : i32, i32, i32
  }
}

</mosaic_0001>

<llo_original>
// kernel: tpu_custom_call.1
$region0: #{tpu_custom_call.1}
  #allocation0 [shape = 'u32[]', space=smem, size = 0x4, offset = 0x4, fixed_abs, tag = 'smem constant byte address 0x4 - core index']
  #allocation1 [shape = 'u32[72,128]{1,0:T(1,128)}', space=vmem, size = 0x9000, scoped, tag = 'internal scratch']
  %s0 = inlined_call_operand.vmem [shape: f32[8,4], index: 0, kind: input, shape index: {}]
  %s1 = inlined_call_operand.vmem [shape: f32[8,4], index: 1, kind: input, shape index: {}]
  %s2 = inlined_call_operand.vmem [shape: f32[2,4,40], index: 2, kind: input, shape index: {}]
  %s3 = inlined_call_operand.hbm [shape: f32[2,4,8], index: 3, kind: output, shape index: {}]
  %s4 = sld [smem:[#allocation0]]
  $region45: #{tpu_custom_call.1} parent=0
    _
  %s6 = ssub.s32 1, %s4
  %s7 = scalar_select 0, %s6, %s4
  $region1: #{tpu_custom_call.1} parent=0
    #allocation2 [shape = 'u8[4096]{0}', space=vmem, size = 0x1000, scoped, tag = 'output window, operand 0']
    #allocation3 [shape = 's32[2]{0}', space=sflag, size = 0x8, scoped, tag = 'scoped memory for tpu_custom_call.1']
    %8 = vsyncpa [#allocation3], 0
    %s9 = scalar_lea.sflag [#allocation3], 1
    %10 = vsyncpa %s9, 0
    loop: start=0, step=1, limit=4
    $region2: #{tpu_custom_call.1} parent=1 // loop_pre_header
      _
    $region3: #{tpu_custom_call.1} parent=1 // loop_header
      %s12 = sphi 0, %s16
      %p13 = scmp.ge.s32.totalorder %s12, 4
      %s19 = sphi 0, %s38
      %s20 = sphi 0, %s34
      %s21 = sphi 0, %s30
      %s22 = sphi 0, %s19
      %s23 = sphi 0, %s20
      %s24 = sphi 0, %s21
      %s25 = sphi 0, %s22
      %s26 = sphi 0, %s23
      %s27 = sphi 0, %s24
      %s41 = sphi 0, %s43
      %s44 = sphi 0, %s41
      %s45 = sphi 0, %s44
      %s61 = sphi 0, %s45
      %s67 = sphi 0, %s69
      %s70 = sphi 0, %s67
      %s71 = sphi 0, %s70
      %s87 = sphi 0, %s71
      %s95 = sphi 0, %s97
      %s98 = sphi 0, %s95
      %s99 = sphi 0, %s98
      %s115 = sphi 0, %s99
      %s125 = sphi 0, %s127
      %s128 = sphi 0, %s125
      %s129 = sphi 0, %s128
      %s145 = sphi 0, %s129
    $region4: #{tpu_custom_call.1} parent=1 // loop_header_branch
      %15 = sbr.rel (%p13) target = $region8
    $region5: #{tpu_custom_call.1} parent=1 // loop_body
      %s17 = ssub.s32 %s12, 1
      %s18 = ssub.s32 %s12, 2
      %s28 = sadd.s32 1, %s21
      %p29 = scmp.ge.s32.totalorder %s28, 1
      %s30 = scalar_select %p29, 0, %s28
      %s31 = sadd.s32 1, %s20
      %s32 = scalar_select %p29, %s31, %s20
      %p33 = scmp.ge.s32.totalorder %s32, 1
      %s34 = scalar_select %p33, 0, %s32
      %s35 = sadd.s32 1, %s19
      %s36 = scalar_select %p33, %s35, %s19
      %p37 = scmp.ge.s32.totalorder %s36, 2
      %s38 = scalar_select %p37, 0, %s36
      %s39 = ssub.s32 %s21, %s30
      %p40 = scmp.eq.s32.totalorder %s39, 0
      %s42 = sadd.s32 %s41, 1
      %s43 = scalar_select %p40, %s41, %s42
      %p46 = pneg %p40
      %p47 = scmp.eq.s32.totalorder %s12, 1
      %p48 = por %p46, %p47
      %p49 = scmp.ne.s32.totalorder %s41, %s44
      %p50 = scmp.eq.s32.totalorder %s12, 0
      %p51 = por %p49, %p50
      %p52 = scmp.ne.s32.totalorder %s41, %s44
      %p53 = scmp.eq.s32.totalorder %s17, 1
      %p54 = por %p52, %p53
      %p55 = scmp.ne.s32.totalorder %s44, %s45
      %p56 = scmp.eq.s32.totalorder %s17, 0
      %p57 = por %p55, %p56
      %p58 = scmp.ne.s32.totalorder %s44, %s45
      %p59 = scmp.eq.s32.totalorder %s18, 1
      %p60 = por %p58, %p59
      %p62 = scmp.ne.s32.totalorder %s45, %s61
      %p63 = scmp.eq.s32.totalorder %s18, 0
      %p64 = por %p62, %p63
      %s65 = ssub.s32 %s21, %s30
      %p66 = scmp.eq.s32.totalorder %s65, 0
      %s68 = sadd.s32 %s67, 1
      %s69 = scalar_select %p66, %s67, %s68
      %p72 = pneg %p66
      %p73 = scmp.eq.s32.totalorder %s12, 1
      %p74 = por %p72, %p73
      %p75 = scmp.ne.s32.totalorder %s67, %s70
      %p76 = scmp.eq.s32.totalorder %s12, 0
      %p77 = por %p75, %p76
      %p78 = scmp.ne.s32.totalorder %s67, %s70
      %p79 = scmp.eq.s32.totalorder %s17, 1
      %p80 = por %p78, %p79
      %p81 = scmp.ne.s32.totalorder %s70, %s71
      %p82 = scmp.eq.s32.totalorder %s17, 0
      %p83 = por %p81, %p82
      %p84 = scmp.ne.s32.totalorder %s70, %s71
      %p85 = scmp.eq.s32.totalorder %s18, 1
      %p86 = por %p84, %p85
      %p88 = scmp.ne.s32.totalorder %s71, %s87
      %p89 = scmp.eq.s32.totalorder %s18, 0
      %p90 = por %p88, %p89
      %s91 = ssub.s32 %s19, %s38
      %s92 = ssub.s32 %s20, %s34
      %s93 = sor.u32 %s91, %s92
      %p94 = scmp.eq.s32.totalorder %s93, 0
      %s96 = sadd.s32 %s95, 1
      %s97 = scalar_select %p94, %s95, %s96
      %p100 = pneg %p94
      %p101 = scmp.eq.s32.totalorder %s12, 1
      %p102 = por %p100, %p101
      %p103 = scmp.ne.s32.totalorder %s95, %s98
      %p104 = scmp.eq.s32.totalorder %s12, 0
      %p105 = por %p103, %p104
      %p106 = scmp.ne.s32.totalorder %s95, %s98
      %p107 = scmp.eq.s32.totalorder %s17, 1
      %p108 = por %p106, %p107
      %p109 = scmp.ne.s32.totalorder %s98, %s99
      %p110 = scmp.eq.s32.totalorder %s17, 0
      %p111 = por %p109, %p110
      %p112 = scmp.ne.s32.totalorder %s98, %s99
      %p113 = scmp.eq.s32.totalorder %s18, 1
      %p114 = por %p112, %p113
      %p116 = scmp.ne.s32.totalorder %s99, %s115
      %p117 = scmp.eq.s32.totalorder %s18, 0
      %p118 = por %p116, %p117
      %s119 = ssub.s32 %s19, %s38
      %s120 = ssub.s32 %s20, %s34
      %s121 = sor.u32 %s119, %s120
      %s122 = ssub.s32 %s21, %s30
      %s123 = sor.u32 %s121, %s122
      %p124 = scmp.eq.s32.totalorder %s123, 0
      %s126 = sadd.s32 %s125, 1
      %s127 = scalar_select %p124, %s125, %s126
      %p130 = pneg %p124
      %p131 = scmp.eq.s32.totalorder %s12, 1
      %p132 = por %p130, %p131
      %p133 = scmp.ne.s32.totalorder %s125, %s128
      %p134 = scmp.eq.s32.totalorder %s12, 0
      %p135 = por %p133, %p134
      %p136 = scmp.ne.s32.totalorder %s125, %s128
      %p137 = scmp.eq.s32.totalorder %s17, 1
      %p138 = por %p136, %p137
      %p139 = scmp.ne.s32.totalorder %s128, %s129
      %p140 = scmp.eq.s32.totalorder %s17, 0
      %p141 = por %p139, %p140
      %p142 = scmp.ne.s32.totalorder %s128, %s129
      %p143 = scmp.eq.s32.totalorder %s18, 1
      %p144 = por %p142, %p143
      %p146 = scmp.ne.s32.totalorder %s129, %s145
      %p147 = scmp.eq.s32.totalorder %s18, 0
      %p148 = por %p146, %p147
      %p149 = scmp.le.s32.totalorder 1, %s12
      %p150 = scmp.lt.s32.totalorder %s12, 3
      %p151 = pnand %p149, %p150
      %p152 = pneg %p151
      // Predicated region
      $region9: #{tpu_custom_call.1} parent=5 // pred_check
        _
      $region10: #{tpu_custom_call.1} parent=5 // pred_check_branch
        %154 = sbr.rel (%p151) target = $region12
      $region11: #{tpu_custom_call.1} parent=5 // pred_region
        %s155 = ssub.s32 %s12, 1
        // Predicated region
        $region13: #{tpu_custom_call.1} parent=11 // pred_check
          %p156 = pneg %p57
        $region14: #{tpu_custom_call.1} parent=11 // pred_check_branch
          %158 = sbr.rel (%p156) target = $region16
        $region15: #{tpu_custom_call.1} parent=11 // pred_region
          %p159 = scmp.lt.s32.totalorder %s24, 0
          %s160 = scalar_select %p159, %s24, 0
          %s161 = smul.addr %s160, 8
          %s162 = scalar_lea.vmem %s0, %s161
        $region16: #{tpu_custom_call.1} parent=11 // pred_fallthru
          _
        // Predicated region
        $region17: #{tpu_custom_call.1} parent=11 // pred_check
          %p163 = pneg %p83
        $region18: #{tpu_custom_call.1} parent=11 // pred_check_branch
          %165 = sbr.rel (%p163) target = $region20
        $region19: #{tpu_custom_call.1} parent=11 // pred_region
          %p166 = scmp.lt.s32.totalorder %s24, 0
          %s167 = scalar_select %p166, %s24, 0
          %s168 = smul.addr %s167, 8
          %s169 = scalar_lea.vmem %s1, %s168
        $region20: #{tpu_custom_call.1} parent=11 // pred_fallthru
          _
      $region12: #{tpu_custom_call.1} parent=5 // pred_fallthru
        _
      %p170 = scmp.lt.s32.totalorder %s12, 2
      // Predicated region
      $region21: #{tpu_custom_call.1} parent=5 // pred_check
        %p171 = pneg %p170
      $region22: #{tpu_custom_call.1} parent=5 // pred_check_branch
        %173 = sbr.rel (%p171) target = $region24
      $region23: #{tpu_custom_call.1} parent=5 // pred_region
        // Predicated region
        $region25: #{tpu_custom_call.1} parent=23 // pred_check
          %p174 = pneg %p105
        $region26: #{tpu_custom_call.1} parent=23 // pred_check_branch
          %176 = sbr.rel (%p174) target = $region28
        $region27: #{tpu_custom_call.1} parent=23 // pred_region
          %p177 = scmp.lt.s32.totalorder %s19, 1
          %s178 = scalar_select %p177, %s19, 1
          %p179 = scmp.lt.s32.totalorder %s20, 0
          %s180 = scalar_select %p179, %s20, 0
          %s181 = sadd.s32 %s180, %s178
          %s182 = smul.addr %s181, 4
          %s183 = scalar_lea.vmem %s2, %s182
        $region28: #{tpu_custom_call.1} parent=23 // pred_fallthru
          _
      $region24: #{tpu_custom_call.1} parent=5 // pred_fallthru
        _
      %p184 = scmp.le.s32.totalorder 1, %s12
      %p185 = scmp.lt.s32.totalorder %s12, 3
      %p186 = pnand %p184, %p185
      %p187 = pneg %p186
      // Predicated region
      $region29: #{tpu_custom_call.1} parent=5 // pred_check
        _
      $region30: #{tpu_custom_call.1} parent=5 // pred_check_branch
        %189 = sbr.rel (%p186) target = $region32
      $region31: #{tpu_custom_call.1} parent=5 // pred_region
        %s190 = ssub.s32 %s12, 1
        %p191 = scmp.lt.s32.totalorder %s24, 0
        %s192 = scalar_select %p191, %s24, 0
        %s193 = smul.addr %s192, 8
        %s194 = scalar_lea.vmem %s0, %s193
        %p195 = pneg %p57
        %p196 = pneg %p54
        %p197 = scmp.lt.s32.totalorder %s24, 0
        %s198 = scalar_select %p197, %s24, 0
        %s199 = smul.addr %s198, 8
        %s200 = scalar_lea.vmem %s1, %s199
        %p201 = pneg %p83
        %p202 = pneg %p80
        %p203 = scmp.lt.s32.totalorder %s22, 1
        %s204 = scalar_select %p203, %s22, 1
        %p205 = scmp.lt.s32.totalorder %s23, 0
        %s206 = scalar_select %p205, %s23, 0
        %s207 = sadd.s32 %s206, %s204
        %s208 = smul.addr %s207, 4
        %s209 = scalar_lea.vmem %s2, %s208
        %p210 = pneg %p111
        %p211 = pneg %p108
        %p212 = pneg %p141
        %p213 = pneg %p138
        %s214 = sand.u32 %s128, 1
        %s215 = scalar_lea.sflag [#allocation3], %s214
        %s216 = sand.u32 %s128, 1
        %s217 = smul.addr %s216, 4
        %s218 = scalar_lea.vmem [#allocation2], %s217
        %p219 = scmp.lt.s32.totalorder %s24, 0
        %s220 = scalar_select %p219, %s24, 0
        %s221 = smul.addr %s220, 8
        %s222 = scalar_lea.vmem %s0, %s221
        %p223 = scmp.lt.s32.totalorder %s24, 0
        %s224 = scalar_select %p223, %s24, 0
        %s225 = smul.addr %s224, 8
        %s226 = scalar_lea.vmem %s1, %s225
        %p227 = scmp.lt.s32.totalorder %s22, 1
        %s228 = scalar_select %p227, %s22, 1
        %p229 = scmp.lt.s32.totalorder %s23, 0
        %s230 = scalar_select %p229, %s23, 0
        %s231 = sadd.s32 %s230, %s228
        %s232 = smul.addr %s231, 4
        %s233 = scalar_lea.vmem %s2, %s232
        %v234 = vld [vmem:[%s233] sm:$0xf]
        %vm235 = vcmask 322560
        %v236 = vsel %vm235, %v234, 0.0
        %237 = vadd.xlane.f32.xlu0 %v236
        %v238 = vpop.xlane.xlu0 %237
        %v239 = vrcp.pop 40.0
        %v240 = vmul.f32 40.0, %v239
        %v241 = vsub.f32 1.0, %v240
        %v242 = vmul.f32 %v239, %v241
        %v243 = vadd.f32 %v239, %v242
        %vm244 = vweird.f32 %v239
        %v245 = vsel %vm244, %v239, %v243
        %v246 = vmul.f32 %v238, %v245
        %v247 = vsub.f32 %v234, %v246
        %v248 = vlaneseq
        %v249 = vand.u32 %v248, 127
        %v250 = vlaneseq
        %v251 = vshrl.u32 %v250, 7
        %v252 = vmul.u32 %v251, 10
        %vm253 = vcmp.ge.s32.totalorder %v249, %v252
        %v254 = vadd.s32 %v252, 10
        %vm255 = vcmp.lt.s32.totalorder %v249, %v254
        %vm256 = vmand %vm253, %vm255
        %v257 = vsel %vm256, 1, 0
        %v258 = vcvt.s32.f32 %v257
        %v259 = vld [vmem:[%s222] sm:$0xff]
        %v260 = vld [vmem:[%s226] sm:$0xff]
        %vm261 = vcmask 326656
        %v263 = vsel %vm261, %v258, 0
        %v266 = vsel %vm261, %v247, 0
        %268 = vmatpush.xpose.msra.mxu0 0.0
        %269 = vmatpush.xpose.msra.mxu0 0.0
        %270 = vmatpush.xpose.msra.mxu0 0.0
        %271 = vmatpush.xpose.msra.mxu0 0.0
        %272 = vmatpush.xpose.msra.mxu0 0.0
        %273 = vmatpush.xpose.msra.mxu0 0.0
        %274 = vmatpush.xpose.msra.mxu0 0.0
        %275 = vmatpush.xpose.msra.mxu0 0.0
        %276 = vmatpush.xpose.msra.mxu0 0.0
        %277 = vmatpush.xpose.msra.mxu0 0.0
        %278 = vmatpush.xpose.msra.mxu0 0.0
        %279 = vmatpush.xpose.msra.mxu0 0.0
        %280 = vmatpush.xpose.msra.mxu0 0.0
        %281 = vmatpush.xpose.msra.mxu0 0.0
        %282 = vmatpush.xpose.msra.mxu0 0.0
        %283 = vmatpush.xpose.msra.mxu0 %v266
        %284 = vmatmul.f32.gmra.mxu0 %v263
        %v285 = vpop.f32.mrf.mxu0
        %v286 = vadd.f32 0.0, %v285
        %287 = vdwg.mxu0
        %vm288 = vcmask 31744
        %v290 = vsel %vm288, %v259, 0
        %vm292 = vcmask 1043456
        %v293 = vsel %vm292, %v247, 0
        %295 = vmatpush.msra.mxu0 0.0
        %296 = vmatpush.msra.mxu0 0.0
        %297 = vmatpush.msra.mxu0 0.0
        %298 = vmatpush.msra.mxu0 0.0
        %299 = vmatpush.msra.mxu0 0.0
        %300 = vmatpush.msra.mxu0 0.0
        %301 = vmatpush.msra.mxu0 0.0
        %302 = vmatpush.msra.mxu0 0.0
        %303 = vmatpush.msra.mxu0 0.0
        %304 = vmatpush.msra.mxu0 0.0
        %305 = vmatpush.msra.mxu0 0.0
        %306 = vmatpush.msra.mxu0 0.0
        %307 = vmatpush.msra.mxu0 0.0
        %308 = vmatpush.msra.mxu0 0.0
        %309 = vmatpush.msra.mxu0 0.0
        %310 = vmatpush.msra.mxu0 %v293
        %311 = vmatmul.f32.gmra.mxu0 %v290
        %v312 = vpop.f32.mrf.mxu0
        %v313 = vadd.f32 0.0, %v312
        %314 = vdwg.mxu0
        %v316 = vsel %vm288, %v260, 0
        %318 = vmatpush.msra.mxu0 0.0
        %319 = vmatpush.msra.mxu0 0.0
        %320 = vmatpush.msra.mxu0 0.0
        %321 = vmatpush.msra.mxu0 0.0
        %322 = vmatpush.msra.mxu0 0.0
        %323 = vmatpush.msra.mxu0 0.0
        %324 = vmatpush.msra.mxu0 0.0
        %325 = vmatpush.msra.mxu0 0.0
        %326 = vmatpush.msra.mxu0 0.0
        %327 = vmatpush.msra.mxu0 0.0
        %328 = vmatpush.msra.mxu0 0.0
        %329 = vmatpush.msra.mxu0 0.0
        %330 = vmatpush.msra.mxu0 0.0
        %331 = vmatpush.msra.mxu0 0.0
        %332 = vmatpush.msra.mxu0 0.0
        %333 = vmatpush.msra.mxu0 %v293
        %334 = vmatmul.f32.gmra.mxu0 %v316
        %v335 = vpop.f32.mrf.mxu0
        %v336 = vadd.f32 0.0, %v335
        %337 = vdwg.mxu0
        %v338 = vmul.f32 %v313, %v336
        %v340 = vsel %vm261, %v338, 0
        %342 = vmatpush.xpose.msra.mxu0 0.0
        %343 = vmatpush.xpose.msra.mxu0 0.0
        %344 = vmatpush.xpose.msra.mxu0 0.0
        %345 = vmatpush.xpose.msra.mxu0 0.0
        %346 = vmatpush.xpose.msra.mxu0 0.0
        %347 = vmatpush.xpose.msra.mxu0 0.0
        %348 = vmatpush.xpose.msra.mxu0 0.0
        %349 = vmatpush.xpose.msra.mxu0 0.0
        %350 = vmatpush.xpose.msra.mxu0 0.0
        %351 = vmatpush.xpose.msra.mxu0 0.0
        %352 = vmatpush.xpose.msra.mxu0 0.0
        %353 = vmatpush.xpose.msra.mxu0 0.0
        %354 = vmatpush.xpose.msra.mxu0 0.0
        %355 = vmatpush.xpose.msra.mxu0 0.0
        %356 = vmatpush.xpose.msra.mxu0 0.0
        %357 = vmatpush.xpose.msra.mxu0 %v340
        %358 = vmatmul.f32.gmra.mxu0 %v263
        %v359 = vpop.f32.mrf.mxu0
        %v360 = vadd.f32 0.0, %v359
        %361 = vdwg.mxu0
        %v363 = vsel %vm288, %v286, 0
        %365 = vmatpush.xpose.msra.mxu0 0.0
        %366 = vmatpush.xpose.msra.mxu0 0.0
        %367 = vmatpush.xpose.msra.mxu0 0.0
        %368 = vmatpush.xpose.msra.mxu0 0.0
        %369 = vmatpush.xpose.msra.mxu0 0.0
        %370 = vmatpush.xpose.msra.mxu0 0.0
        %371 = vmatpush.xpose.msra.mxu0 0.0
        %372 = vmatpush.xpose.msra.mxu0 0.0
        %373 = vmatpush.xpose.msra.mxu0 0.0
        %374 = vmatpush.xpose.msra.mxu0 0.0
        %375 = vmatpush.xpose.msra.mxu0 0.0
        %376 = vmatpush.xpose.msra.mxu0 0.0
        %377 = vmatpush.xpose.msra.mxu0 0.0
        %378 = vmatpush.xpose.msra.mxu0 0.0
        %379 = vmatpush.xpose.msra.mxu0 0.0
        %380 = vmatpush.xpose.msra.mxu0 %v290
        %381 = vmatmul.f32.gmra.mxu0 %v363
        %v382 = vpop.f32.mrf.mxu0
        %v383 = vadd.f32 0.0, %v382
        %384 = vdwg.mxu0
        %385 = vmatpush.xpose.msra.mxu0 0.0
        %386 = vmatpush.xpose.msra.mxu0 0.0
        %387 = vmatpush.xpose.msra.mxu0 0.0
        %388 = vmatpush.xpose.msra.mxu0 0.0
        %389 = vmatpush.xpose.msra.mxu0 0.0
        %390 = vmatpush.xpose.msra.mxu0 0.0
        %391 = vmatpush.xpose.msra.mxu0 0.0
        %392 = vmatpush.xpose.msra.mxu0 0.0
        %393 = vmatpush.xpose.msra.mxu0 0.0
        %394 = vmatpush.xpose.msra.mxu0 0.0
        %395 = vmatpush.xpose.msra.mxu0 0.0
        %396 = vmatpush.xpose.msra.mxu0 0.0
        %397 = vmatpush.xpose.msra.mxu0 0.0
        %398 = vmatpush.xpose.msra.mxu0 0.0
        %399 = vmatpush.xpose.msra.mxu0 0.0
        %400 = vmatpush.xpose.msra.mxu0 %v316
        %401 = vmatmul.f32.gmra.mxu0 %v363
        %v402 = vpop.f32.mrf.mxu0
        %v403 = vadd.f32 0.0, %v402
        %404 = vdwg.mxu0
        %v405 = vmul.f32 %v383, %v403
        %v406 = vmul.f32 %v405, 0.1
        %v407 = vsub.f32 %v360, %v406
        %v408 = vmul.f32 %v407, 0.1
        %vm409 = vcmask 60416
        %410 = vst.msk [vmem:[%s218] sm:$0xf] %vm409, %v408
        %s411 = sand.u32 %s128, 1
        %s412 = scalar_lea.sflag [#allocation3], %s411
        %s413 = sand.u32 %s128, 1
        %s414 = smul.addr %s413, 4
        %s415 = scalar_lea.vmem [#allocation2], %s414
        // Predicated region
        $region33: #{tpu_custom_call.1} parent=31 // pred_check
          %p416 = pneg %p138
        $region34: #{tpu_custom_call.1} parent=31 // pred_check_branch
          %418 = sbr.rel (%p416) target = $region36
        $region35: #{tpu_custom_call.1} parent=31 // pred_region
          %420 = vsyncadd %s412, 0
          %s421 = sadd.s32 %s24, %s23
          %s422 = sadd.s32 %s421, %s22
          %s423 = smul.addr %s422, 4
          %s424 = scalar_lea.hbm %s3, %s423
          %s426 = sshll.u32 %s415, 4
          %s427 = int_to_ptr.vmem [resolvable:$true] %s426
          %s428 = sshll.u32 %s424, 4
          %s429 = int_to_ptr.hbm [resolvable:$true] %s428
          %431 = dma.vmem_to_hbm [thread:$0]  %s427, 64, %s429, %s412
        $region36: #{tpu_custom_call.1} parent=31 // pred_fallthru
          _
      $region32: #{tpu_custom_call.1} parent=5 // pred_fallthru
        _
      %p432 = scmp.le.s32.totalorder 2, %s12
      // Predicated region
      $region37: #{tpu_custom_call.1} parent=5 // pred_check
        %p433 = pneg %p432
      $region38: #{tpu_custom_call.1} parent=5 // pred_check_branch
        %435 = sbr.rel (%p433) target = $region40
      $region39: #{tpu_custom_call.1} parent=5 // pred_region
        %s436 = ssub.s32 %s12, 2
        // Predicated region
        $region41: #{tpu_custom_call.1} parent=39 // pred_check
          %p437 = pneg %p144
        $region42: #{tpu_custom_call.1} parent=39 // pred_check_branch
          %439 = sbr.rel (%p437) target = $region44
        $region43: #{tpu_custom_call.1} parent=39 // pred_region
          %s440 = sand.u32 %s129, 1
          %s441 = scalar_lea.sflag [#allocation3], %s440
          %s442 = sand.u32 %s129, 1
          %s443 = smul.addr %s442, 4
          %s444 = scalar_lea.vmem [#allocation2], %s443
          %446 = dma.done %s441, 64
        $region44: #{tpu_custom_call.1} parent=39 // pred_fallthru
          _
      $region40: #{tpu_custom_call.1} parent=5 // pred_fallthru
        _
    $region6: #{tpu_custom_call.1} parent=1 // loop_footer
      %s16 = sadd.s32 1, %s12
    $region7: #{tpu_custom_call.1} parent=1 // loop_footer_branch
      %11 = sbr.rel target = $region3
    $region8: #{tpu_custom_call.1} parent=1 // loop_exit
      _
    %447 = vsyncpa [#allocation3], 1
    %s448 = scalar_lea.sflag [#allocation3], 1
    %449 = vsyncpa %s448, 1

</llo_original>
